<compile_context>
chip_gen: v5e
topology: v5e:2x2
jax: 0.10.0
libtpu: 0.0.40
codegen_flags: <defaults>
</compile_context>

<pallas_src>
import functools

import jax
import jax.numpy as jnp
from jax.experimental import pallas as pl
from jax.experimental.pallas import tpu as pltpu


_VMEM_LIMIT = 48 * 1024 * 1024   # explicit scoped-VMEM cap; fits v5e/v6e and v7x (64 MiB phys)


def _cparams(dims):
    return pltpu.CompilerParams(dimension_semantics=dims, vmem_limit_bytes=_VMEM_LIMIT)


# ----------------------------- tiled linear ---------------------------------

def _matmul_kernel(x_ref, w_ref, o_ref, acc_ref):
    @pl.when(pl.program_id(2) == 0)
    def _():
        acc_ref[...] = jnp.zeros_like(acc_ref)
    acc_ref[...] += jnp.dot(x_ref[...], w_ref[...], preferred_element_type=jnp.float32)

    @pl.when(pl.program_id(2) == pl.num_programs(2) - 1)
    def _():
        o_ref[...] = acc_ref[...].astype(o_ref.dtype)


def _matmul_bias_kernel(x_ref, w_ref, b_ref, o_ref, acc_ref):
    @pl.when(pl.program_id(2) == 0)
    def _():
        acc_ref[...] = jnp.zeros_like(acc_ref)
    acc_ref[...] += jnp.dot(x_ref[...], w_ref[...], preferred_element_type=jnp.float32)

    @pl.when(pl.program_id(2) == pl.num_programs(2) - 1)
    def _():
        o_ref[...] = (acc_ref[...] + b_ref[...].astype(jnp.float32)).astype(o_ref.dtype)


def linear(x, wt, b=None, *, out_dtype=jnp.bfloat16, bm=512, bn=512, bk=512):
    """y = x @ wt (+ b).  x:(T,K) bf16, wt:(K,N) bf16 pre-transposed at init, b:(1,N)|None."""
    T, K = x.shape
    N = wt.shape[1]
    tm, tn, tk = min(T, bm), min(N, bn), min(K, bk)
    grid = (pl.cdiv(T, tm), pl.cdiv(N, tn), pl.cdiv(K, tk))
    cp = _cparams(("parallel", "parallel", "arbitrary"))
    out_shape = jax.ShapeDtypeStruct((T, N), out_dtype)
    out_spec = pl.BlockSpec((tm, tn), lambda i, j, k: (i, j))
    x_spec = pl.BlockSpec((tm, tk), lambda i, j, k: (i, k))
    w_spec = pl.BlockSpec((tk, tn), lambda i, j, k: (k, j))
    scratch = [pltpu.VMEM((tm, tn), jnp.float32)]
    if b is None:
        return pl.pallas_call(
            _matmul_kernel, out_shape=out_shape, grid=grid,
            in_specs=[x_spec, w_spec], out_specs=out_spec,
            scratch_shapes=scratch, compiler_params=cp,
        )(x, wt)
    b_spec = pl.BlockSpec((1, tn), lambda i, j, k: (0, j))
    return pl.pallas_call(
        _matmul_bias_kernel, out_shape=out_shape, grid=grid,
        in_specs=[x_spec, w_spec, b_spec], out_specs=out_spec,
        scratch_shapes=scratch, compiler_params=cp,
    )(x, wt, b)


# ------------------- fused gate_up matmul + SwiGLU epilogue ------------------

def _gate_up_swiglu_kernel(x_ref, wg_ref, wu_ref, o_ref, accg_ref, accu_ref):
    @pl.when(pl.program_id(2) == 0)
    def _():
        accg_ref[...] = jnp.zeros_like(accg_ref)
        accu_ref[...] = jnp.zeros_like(accu_ref)
    x = x_ref[...]
    accg_ref[...] += jnp.dot(x, wg_ref[...], preferred_element_type=jnp.float32)
    accu_ref[...] += jnp.dot(x, wu_ref[...], preferred_element_type=jnp.float32)

    @pl.when(pl.program_id(2) == pl.num_programs(2) - 1)
    def _():
        g = accg_ref[...]
        # hidden_act = silu (Qwen); silu(g) * u fused into the matmul epilogue.
        o_ref[...] = (g * jax.nn.sigmoid(g) * accu_ref[...]).astype(o_ref.dtype)


def gate_up_swiglu(x, w_gate_t, w_up_t, *, out_dtype=jnp.bfloat16, bm=512, bn=512, bk=512):
    """silu(x @ w_gate_t) * (x @ w_up_t)."""
    T, K = x.shape
    N = w_gate_t.shape[1]
    tm, tn, tk = min(T, bm), min(N, bn), min(K, bk)
    grid = (pl.cdiv(T, tm), pl.cdiv(N, tn), pl.cdiv(K, tk))
    return pl.pallas_call(
        _gate_up_swiglu_kernel,
        out_shape=jax.ShapeDtypeStruct((T, N), out_dtype),
        grid=grid,
        in_specs=[pl.BlockSpec((tm, tk), lambda i, j, k: (i, k)),
                  pl.BlockSpec((tk, tn), lambda i, j, k: (k, j)),
                  pl.BlockSpec((tk, tn), lambda i, j, k: (k, j))],
        out_specs=pl.BlockSpec((tm, tn), lambda i, j, k: (i, j)),
        scratch_shapes=[pltpu.VMEM((tm, tn), jnp.float32),
                        pltpu.VMEM((tm, tn), jnp.float32)],
        compiler_params=_cparams(("parallel", "parallel", "arbitrary")),
    )(x, w_gate_t, w_up_t)


# ------------------------------- RMSNorm -------------------------------------

def _rmsnorm_kernel(x_ref, w_ref, o_ref, *, eps):
    xf = x_ref[...].astype(jnp.float32)
    var = jnp.mean(xf * xf, axis=-1, keepdims=True)
    o_ref[...] = (w_ref[...].astype(jnp.float32) * (xf * jax.lax.rsqrt(var + eps))
                  ).astype(o_ref.dtype)


def _rmsnorm_res_kernel(x_ref, r_ref, w_ref, o_ref, res_ref, *, eps):
    xr = x_ref[...].astype(jnp.float32) + r_ref[...].astype(jnp.float32)
    res_ref[...] = xr.astype(res_ref.dtype)
    var = jnp.mean(xr * xr, axis=-1, keepdims=True)
    o_ref[...] = (w_ref[...].astype(jnp.float32) * (xr * jax.lax.rsqrt(var + eps))
                  ).astype(o_ref.dtype)


def rmsnorm(x, residual, weight, eps, *, block_rows=256):
    """QwenRMSNorm with optional fused residual add. Returns (normed, residual_out)."""
    T, H = x.shape
    tm = min(T, block_rows)
    grid = (pl.cdiv(T, tm),)
    w2 = weight.reshape(1, H)
    cp = _cparams(("parallel",))
    x_spec = pl.BlockSpec((tm, H), lambda i: (i, 0))
    w_spec = pl.BlockSpec((1, H), lambda i: (0, 0))
    o_spec = pl.BlockSpec((tm, H), lambda i: (i, 0))
    if residual is None:
        normed = pl.pallas_call(
            functools.partial(_rmsnorm_kernel, eps=eps),
            out_shape=jax.ShapeDtypeStruct((T, H), x.dtype), grid=grid,
            in_specs=[x_spec, w_spec], out_specs=o_spec, compiler_params=cp,
        )(x, w2)
        return normed, x   # residual is the (unmodified) input -> no extra HBM copy
    return pl.pallas_call(
        functools.partial(_rmsnorm_res_kernel, eps=eps),
        out_shape=(jax.ShapeDtypeStruct((T, H), x.dtype),
                   jax.ShapeDtypeStruct((T, H), x.dtype)),
        grid=grid, in_specs=[x_spec, x_spec, w_spec],
        out_specs=(o_spec, o_spec), compiler_params=cp,
    )(x, residual, w2)


# --------------------------- fused NeoX rotary --------------------------------

def _rotary_kernel(x_ref, cos_ref, sin_ref, o_ref, *, half):
    # out[:, :half] = x1*cos - x2*sin ; out[:, half:] = x2*cos + x1*sin
    # implemented as x*cos_cat + roll(x, half)*sin_cat with sin_cat = [-sin | sin].
    x = x_ref[...].astype(jnp.float32)
    rot = pltpu.roll(x, shift=half, axis=1)
    o_ref[...] = (x * cos_ref[...] + rot * sin_ref[...]).astype(o_ref.dtype)


def rotary_qk(qkv, cos, sin, num_heads, head_dim, *, block_rows=256):
    """Apply rotary to the q and k column blocks of qkv (T, 3*proj) -> (T, 2*proj)."""
    assert head_dim % 128 == 0, "rotary/attention kernels assume head_dim % 128 == 0 (Qwen uses 128)"
    T = qkv.shape[0]
    hd, nh = head_dim, num_heads
    rb = min(T, block_rows)
    cos_cat = jnp.concatenate([cos, cos], axis=-1).astype(jnp.float32)    # (T, hd)
    sin_cat = jnp.concatenate([-sin, sin], axis=-1).astype(jnp.float32)   # (T, hd)
    return pl.pallas_call(
        functools.partial(_rotary_kernel, half=hd // 2),
        out_shape=jax.ShapeDtypeStruct((T, 2 * nh * hd), qkv.dtype),
        grid=(pl.cdiv(T, rb), 2 * nh),
        in_specs=[pl.BlockSpec((rb, hd), lambda i, h: (i, h)),
                  pl.BlockSpec((rb, hd), lambda i, h: (i, 0)),
                  pl.BlockSpec((rb, hd), lambda i, h: (i, 0))],
        out_specs=pl.BlockSpec((rb, hd), lambda i, h: (i, h)),
        compiler_params=_cparams(("parallel", "parallel")),
    )(qkv, cos_cat, sin_cat)


# -------------------- blocked causal flash attention (prefill) ---------------

def _flash_attn_kernel(seg_smem, segq_ref, segk_ref, q_ref, k_ref, v_ref, o_ref,
                       m_ref, l_ref, acc_ref, *, scale, tq, tkv, seq_len):
    qi = pl.program_id(1)
    kv = pl.program_id(2)
    q_start = qi * tq
    kv_start = kv * tkv

    @pl.when(kv == 0)
    def _():
        m_ref[...] = jnp.full_like(m_ref, -jnp.inf)
        l_ref[...] = jnp.zeros_like(l_ref)
        acc_ref[...] = jnp.zeros_like(acc_ref)

    # Skip KV blocks that are entirely above the causal diagonal (their DMA is also
    # skipped via the clamped kv index_map in the wrapper).
    @pl.when(kv_start <= q_start + tq - 1)
    def _():
        s = jax.lax.dot_general(q_ref[...], k_ref[...], (((1,), (1,)), ((), ())),
                                preferred_element_type=jnp.float32) * scale

        def update(s_blk, p_mask):
            m_prev = m_ref[...]
            m_new = jnp.maximum(m_prev, jnp.max(s_blk, axis=-1, keepdims=True))
            alpha = jnp.exp(m_prev - m_new)
            p = jnp.exp(s_blk - m_new)
            if p_mask is not None:
                p = jnp.where(p_mask, p, 0.0)
            l_ref[...] = alpha * l_ref[...] + jnp.sum(p, axis=-1, keepdims=True)
            acc_ref[...] = alpha * acc_ref[...] + jax.lax.dot_general(
                p.astype(v_ref.dtype), v_ref[...], (((1,), (0,)), ((), ())),
                preferred_element_type=jnp.float32)
            m_ref[...] = m_new

        # Scalar fast-path check (segment ids live in SMEM via scalar prefetch):
        # block strictly below the diagonal, fully in bounds, and both the q and kv
        # blocks lie in the same packed sequence -> no per-element mask needed at all.
        q_first = seg_smem[q_start]
        q_last = seg_smem[jnp.minimum(q_start + tq - 1, seq_len - 1)]
        k_first = seg_smem[kv_start]
        k_last = seg_smem[jnp.minimum(kv_start + tkv - 1, seq_len - 1)]
        same_seg = (q_first == q_last) & (q_first == k_first) & (k_first == k_last)
        no_mask = (kv_start + tkv <= q_start) & same_seg & (kv_start + tkv <= seq_len)

        @pl.when(no_mask)
        def _():
            update(s, None)

        @pl.when(jnp.logical_not(no_mask))
        def _():
            row = q_start + jax.lax.broadcasted_iota(jnp.int32, (tq, tkv), 0)
            col = kv_start + jax.lax.broadcasted_iota(jnp.int32, (tq, tkv), 1)
            seg_ok = segq_ref[...] == segk_ref[...]
            mask = (col <= row) & seg_ok
            if seq_len % tkv != 0:
                mask = mask & (col < seq_len)
            update(jnp.where(mask, s, -1e30), mask)

    @pl.when(kv == pl.num_programs(2) - 1)
    def _():
        o_ref[...] = (acc_ref[...] * pl.reciprocal(l_ref[...], approx=True)).astype(o_ref.dtype)


def flash_attention(qk_rot, qkv, seg_ids, num_heads, head_dim, scale, *,
                    block_q=256, block_kv=512):
    """Causal prefill attention with per-sequence (cu_seqlen) masking.
    qk_rot: (T, 2*proj) rotated [q | k]; qkv: (T, 3*proj) (v is the last proj columns);
    seg_ids: (T,) int32 sequence id per token.  Returns attention output (T, proj)."""
    assert head_dim % 128 == 0, "attention head slicing assumes head_dim % 128 == 0"
    T = qkv.shape[0]
    nh, hd = num_heads, head_dim
    proj = nh * hd
    tq, tkv = min(T, block_q), min(T, block_kv)
    nq, nkv = pl.cdiv(T, tq), pl.cdiv(T, tkv)
    seg_ids = seg_ids.astype(jnp.int32)
    segq = seg_ids.reshape(T, 1)
    segk = seg_ids.reshape(1, T)   # lane-dense K-side segment ids (no in-kernel reshape)

    def kv_row(qi, kv):
        # clamp at the causal diagonal: skipped upper-triangular steps re-use the
        # previously fetched block index, so Pallas skips their DMA as well.
        return jnp.minimum(kv, (qi * tq + tq - 1) // tkv)

    grid_spec = pltpu.PrefetchScalarGridSpec(
        num_scalar_prefetch=1,
        grid=(nh, nq, nkv),
        in_specs=[
            pl.BlockSpec((tq, 1), lambda h, qi, kv, seg: (qi, 0)),
            pl.BlockSpec((1, tkv), lambda h, qi, kv, seg: (0, kv_row(qi, kv))),
            # Q / K read straight from qk_rot, V from qkv, by head-sized column blocks.
            pl.BlockSpec((tq, hd), lambda h, qi, kv, seg: (qi, h)),
            pl.BlockSpec((tkv, hd), lambda h, qi, kv, seg: (kv_row(qi, kv), nh + h)),
            pl.BlockSpec((tkv, hd), lambda h, qi, kv, seg: (kv_row(qi, kv), 2 * nh + h)),
        ],
        out_specs=pl.BlockSpec((tq, hd), lambda h, qi, kv, seg: (qi, h)),
        scratch_shapes=[pltpu.VMEM((tq, 1), jnp.float32),
                        pltpu.VMEM((tq, 1), jnp.float32),
                        pltpu.VMEM((tq, hd), jnp.float32)],
    )
    return pl.pallas_call(
        functools.partial(_flash_attn_kernel, scale=scale, tq=tq, tkv=tkv, seq_len=T),
        out_shape=jax.ShapeDtypeStruct((T, proj), qkv.dtype),
        grid_spec=grid_spec,
        compiler_params=_cparams(("parallel", "parallel", "arbitrary")),
    )(seg_ids, segq, segk, qk_rot, qk_rot, qkv)


# ----------------------------- JAX glue --------------------------------------

def get_cos_sin(position_ids, head_dim, rope_theta):
    pos = position_ids.astype(jnp.float32)
    inv_freq = 1.0 / (rope_theta ** (jnp.arange(0, head_dim, 2, dtype=jnp.float32) / head_dim))
    freqs = pos[:, None] * inv_freq[None, :]
    return jnp.cos(freqs), jnp.sin(freqs)


def segment_ids_from_cu(cu_seqlen_prefill, num_tokens):
    return (jnp.searchsorted(cu_seqlen_prefill, jnp.arange(num_tokens, dtype=jnp.int32),
                             side="right") - 1).astype(jnp.int32)


def init_params(key, config):
    H = config["hidden_size"]
    nh = config["num_attention_heads"]
    proj = config["kv_channels"] * nh
    inner = config["intermediate_size"] // 2
    vocab = config["vocab_size"]

    def nrm(k, shape):
        return (jax.random.normal(k, shape, jnp.float32) * 0.05).astype(jnp.bfloat16)

    keys = jax.random.split(key, 2 + 8 * config["num_hidden_layers"])
    params = {"wte": nrm(keys[0], (vocab, H)),
              "ln_f": jnp.ones((H,), jnp.float32),
              "layers": []}
    ki = 2
    for _ in range(config["num_hidden_layers"]):
        # weights stored pre-transposed to (K, N) bf16 so kernels never transpose.
        lp = {
            "ln_1": jnp.ones((H,), jnp.float32),
            "ln_2": jnp.ones((H,), jnp.float32),
            "c_attn_wt": nrm(keys[ki + 0], (H, 3 * proj)),
            "c_attn_b": (jax.random.normal(keys[ki + 1], (1, 3 * proj), jnp.float32) * 0.05),
            "attn_c_proj_wt": nrm(keys[ki + 2], (proj, H)),
            # gate_up = load_multi([w2, w1], dim=0): act on w2 output, multiply by w1 output.
            "w2_t": nrm(keys[ki + 3], (H, inner)),   # gate
            "w1_t": nrm(keys[ki + 4], (H, inner)),   # up
            "mlp_c_proj_wt": nrm(keys[ki + 5], (inner, H)),
        }
        ki += 8
        params["layers"].append(lp)
    return params


def flash_qwen_forward(params, input_ids, position_ids, cu_seqlen_prefill,
                       kv_cache, block_tables, slots, input_lengths, max_s, config):
    H = config["hidden_size"]
    nh = config["num_attention_heads"]
    hd = H // nh
    proj = config["kv_channels"] * nh
    eps = config["layer_norm_epsilon"]
    scale = hd ** (-0.5)
    T = input_ids.shape[0]

    hidden = params["wte"][input_ids]                               # (T, H) bf16 (glue)
    cos, sin = get_cos_sin(position_ids, hd, config["rope_theta"])
    seg_ids = segment_ids_from_cu(cu_seqlen_prefill, T)             # per-sequence mask ids

    residual = None
    new_kv_cache = []
    for i, lp in enumerate(params["layers"]):
        normed, res = rmsnorm(hidden, residual, lp["ln_1"], eps)

        # --- attention ---
        qkv = linear(normed, lp["c_attn_wt"], lp["c_attn_b"], bn=1024)   # (T, 3*proj) bf16
        qk_rot = rotary_qk(qkv, cos, sin, nh, hd)                        # (T, 2*proj) bf16

        # paged_attn.reshape_and_cache equivalent (scatter rotated K and V at `slots`).
        # TODO(synk): replace the XLA scatter with an in-place Pallas DMA scatter using
        # input_output_aliases once cache buffers are donated by the serving loop.
        kc, vc = kv_cache[i]
        k_rot = qk_rot[:, proj:].reshape(T, nh, hd)
        v_new = qkv[:, 2 * proj:].reshape(T, nh, hd)
        kc = kc.at[slots].set(k_rot.astype(kc.dtype))
        vc = vc.at[slots].set(v_new.astype(vc.dtype))
        new_kv_cache.append((kc, vc))

        # prefill path: blocked causal flash attention, head-sliced directly from
        # qk_rot / qkv (no transposes), output written as (T, nh*hd).
        attn = flash_attention(qk_rot, qkv, seg_ids, nh, hd, scale)
        attn_out = linear(attn, lp["attn_c_proj_wt"], None)
        # TODO(synk): decode-path paged_attn.single_query_cached_kv_attention
        # (block_tables / input_lengths) not implemented; only cu_seqlen_prefill covered.

        normed2, attn_res = rmsnorm(attn_out, res, lp["ln_2"], eps)

        # --- MLP: fused gate_up matmul + SwiGLU epilogue, then down proj ---
        act = gate_up_swiglu(normed2, lp["w2_t"], lp["w1_t"], bn=1024)   # (T, inner) bf16
        mlp_out = linear(act, lp["mlp_c_proj_wt"], None)

        hidden = mlp_out
        residual = attn_res

    hidden, _ = rmsnorm(hidden, residual, params["ln_f"], eps)
    return hidden, new_kv_cache


# ----------------------------- driver ---------------------------------------

if __name__ == "__main__":
    config = dict(
        vocab_size=128,
        hidden_size=256,
        num_attention_heads=2,
        kv_channels=128,            # == head_size (Qwen uses 128)
        num_hidden_layers=2,
        intermediate_size=512,      # ffn inner dim = intermediate_size // 2 = 256
        layer_norm_epsilon=1e-6,
        rope_theta=10000.0,
    )
    T = 8
    nh = config["num_attention_heads"]
    hd = config["hidden_size"] // nh

    key = jax.random.PRNGKey(0)
    pkey, ikey = jax.random.split(key)
    params = init_params(pkey, config)

    input_ids = jax.random.randint(ikey, (T,), 0, config["vocab_size"], dtype=jnp.int32)
    position_ids = jnp.arange(T, dtype=jnp.int32)
    cu_seqlen_prefill = jnp.array([0, T], dtype=jnp.int32)
    slots = jnp.arange(T, dtype=jnp.int32)
    block_tables = jnp.zeros((1, 1), dtype=jnp.int32)
    input_lengths = jnp.array([T], dtype=jnp.int32)
    max_s = T
    num_cache_slots = 16
    kv_cache = [(jnp.zeros((num_cache_slots, nh, hd), jnp.bfloat16),
                 jnp.zeros((num_cache_slots, nh, hd), jnp.bfloat16))
                for _ in range(config["num_hidden_layers"])]

    out, _ = flash_qwen_forward(params, input_ids, position_ids, cu_seqlen_prefill,
                                kv_cache, block_tables, slots, input_lengths, max_s, config)
    out = jax.block_until_ready(out)
    assert out.shape == (T, config["hidden_size"])
    assert bool(jnp.all(jnp.isfinite(out.astype(jnp.float32))))
    print("KERNEL_OK")
</pallas_src>

<mosaic_0001>
module attributes {stable_mosaic.version = 11 : i64} {
  func.func @_rmsnorm_kernel(%arg0: i32, %arg1: memref<8x256xbf16, #tpu.memory_space<vmem>>, %arg2: memref<1x256xf32, #tpu.memory_space<vmem>>, %arg3: memref<8x256xbf16, #tpu.memory_space<vmem>>) attributes {dimension_semantics = [#tpu.dimension_semantics<parallel>], iteration_bounds = array<i64: 1>, scalar_prefetch = 0 : i64, scratch_operands = 0 : i64, tpu.core_type = #tpu.core_type<tc>, window_params = [{transform_indices = @transform_0, window_bounds = array<i64: 8, 256>}, {pipeline_mode = #tpu.pipeline_mode<synchronous>, transform_indices = @transform_1, window_bounds = array<i64: 1, 256>}, {transform_indices = @transform_2, window_bounds = array<i64: 8, 256>}]} {
    %c0 = arith.constant 0 : index
    %c0_0 = arith.constant 0 : index
    %0 = vector.load %arg1[%c0, %c0_0] : memref<8x256xbf16, #tpu.memory_space<vmem>>, vector<8x256xbf16>
    %1 = arith.extf %0 : vector<8x256xbf16> to vector<8x256xf32>
    %2 = arith.mulf %1, %1 : vector<8x256xf32>
    %cst = arith.constant dense<0.000000e+00> : vector<8xf32>
    %3 = vector.multi_reduction <add>, %2, %cst [1] : vector<8x256xf32> to vector<8xf32>
    %4 = vector.shape_cast %3 : vector<8xf32> to vector<8x1xf32>
    %cst_1 = arith.constant 2.560000e+02 : f32
    %5 = vector.broadcast %cst_1 : f32 to vector<8x1xf32>
    %6 = arith.divf %4, %5 : vector<8x1xf32>
    %c0_2 = arith.constant 0 : index
    %c0_3 = arith.constant 0 : index
    %7 = vector.load %arg2[%c0_2, %c0_3] : memref<1x256xf32, #tpu.memory_space<vmem>>, vector<1x256xf32>
    %cst_4 = arith.constant 9.99999997E-7 : f32
    %8 = vector.broadcast %cst_4 : f32 to vector<8x1xf32>
    %9 = arith.addf %6, %8 : vector<8x1xf32>
    %10 = math.rsqrt %9 : vector<8x1xf32>
    %11 = vector.broadcast %10 : vector<8x1xf32> to vector<8x256xf32>
    %12 = arith.mulf %1, %11 : vector<8x256xf32>
    %13 = vector.broadcast %7 : vector<1x256xf32> to vector<8x256xf32>
    %14 = arith.mulf %13, %12 : vector<8x256xf32>
    %15 = arith.truncf %14 : vector<8x256xf32> to vector<8x256xbf16>
    %c0_5 = arith.constant 0 : index
    %c0_6 = arith.constant 0 : index
    %16 = vector.load %arg3[%c0_5, %c0_6] : memref<8x256xbf16, #tpu.memory_space<vmem>>, vector<8x256xbf16>
    tpu.vector_store %arg3[%c0_5, %c0_6], %15 {strides = array<i32>} : memref<8x256xbf16, #tpu.memory_space<vmem>>, vector<8x256xbf16>,
    return
  }
  func.func @transform_0(%arg0: i32) -> (i32, i32) {
    %c0_i32 = arith.constant 0 : i32
    %c0_i32_0 = arith.constant 0 : i32
    return %arg0, %c0_i32 : i32, i32
  }
  func.func @transform_1(%arg0: i32) -> (i32, i32) {
    %c0_i32 = arith.constant 0 : i32
    %c0_i32_0 = arith.constant 0 : i32
    %c0_i32_1 = arith.constant 0 : i32
    return %c0_i32, %c0_i32_0 : i32, i32
  }
  func.func @transform_2(%arg0: i32) -> (i32, i32) {
    %c0_i32 = arith.constant 0 : i32
    %c0_i32_0 = arith.constant 0 : i32
    return %arg0, %c0_i32 : i32, i32
  }
}

</mosaic_0001>

<llo_original>
// kernel: tpu_custom_call.1
$region0: #{tpu_custom_call.1}
  #allocation0 [shape = 'u32[]', space=smem, size = 0x4, offset = 0x4, fixed_abs, tag = 'smem constant byte address 0x4 - core index']
  #allocation1 [shape = 'u32[72,128]{1,0:T(1,128)}', space=vmem, size = 0x9000, scoped, tag = 'internal scratch']
  %s0 = inlined_call_operand.hbm [shape: bf16[8,256], index: 0, kind: input, shape index: {}]
  %s1 = inlined_call_operand.hbm [shape: f32[1,256], index: 1, kind: input, shape index: {}]
  %s2 = inlined_call_operand.hbm [shape: bf16[8,256], index: 2, kind: output, shape index: {}]
  %s3 = sld [smem:[#allocation0]]
  $region26: #{tpu_custom_call.1} parent=0
    _
  %s5 = ssub.s32 1, %s3
  %s6 = scalar_select 0, %s5, %s3
  $region1: #{tpu_custom_call.1} parent=0
    #allocation2 [shape = 'u8[4096]{0}', space=vmem, size = 0x1000, scoped, tag = 'input window, operand 0, single buffered']
    #allocation3 [shape = 's32[1]{0}', space=sflag, size = 0x4, scoped, tag = 'scoped memory for tpu_custom_call.1']
    #allocation4 [shape = 's32[1]{0}', space=sflag, size = 0x4, scoped, tag = 'scoped memory for tpu_custom_call.1']
    #allocation5 [shape = 'u8[1024]{0}', space=vmem, size = 0x400, scoped, tag = 'input window, operand 1, single buffered']
    #allocation6 [shape = 's32[1]{0}', space=sflag, size = 0x4, scoped, tag = 'scoped memory for tpu_custom_call.1']
    #allocation7 [shape = 'u8[4096]{0}', space=vmem, size = 0x1000, scoped, tag = 'output window, operand 0, single buffered']
    %7 = vsyncpa [#allocation3], 0
    %8 = vsyncpa [#allocation6], 0
    %9 = vsyncpa [#allocation4], 0
    // Predicated region
    $region2: #{tpu_custom_call.1} parent=1 // pred_check
      _
    $region3: #{tpu_custom_call.1} parent=1 // pred_check_branch
      %11 = sbr.rel (0) target = $region5
    $region4: #{tpu_custom_call.1} parent=1 // pred_region
      %13 = vsyncadd [#allocation3], 0
      %s15 = sshll.u32 %s0, 4
      %s16 = int_to_ptr.hbm [resolvable:$true] %s15
      %s17 = sshll.u32 [#allocation2], 4
      %s18 = int_to_ptr.vmem [resolvable:$true] %s17
      %20 = dma.hbm_to_vmem [thread:$0]  %s16, 128, %s18, [#allocation3]
    $region5: #{tpu_custom_call.1} parent=1 // pred_fallthru
      _
    // Predicated region
    $region6: #{tpu_custom_call.1} parent=1 // pred_check
      _
    $region7: #{tpu_custom_call.1} parent=1 // pred_check_branch
      %22 = sbr.rel (0) target = $region9
    $region8: #{tpu_custom_call.1} parent=1 // pred_region
      %24 = vsyncadd [#allocation6], 0
      %s26 = sshll.u32 %s1, 4
      %s27 = int_to_ptr.hbm [resolvable:$true] %s26
      %s28 = sshll.u32 [#allocation5], 4
      %s29 = int_to_ptr.vmem [resolvable:$true] %s28
      %31 = dma.hbm_to_vmem [thread:$0]  %s27, 32, %s29, [#allocation6]
    $region9: #{tpu_custom_call.1} parent=1 // pred_fallthru
      _
    // Predicated region
    $region10: #{tpu_custom_call.1} parent=1 // pred_check
      _
    $region11: #{tpu_custom_call.1} parent=1 // pred_check_branch
      %33 = sbr.rel (0) target = $region13
    $region12: #{tpu_custom_call.1} parent=1 // pred_region
      %35 = dma.done [#allocation3], 128
    $region13: #{tpu_custom_call.1} parent=1 // pred_fallthru
      _
    // Predicated region
    $region14: #{tpu_custom_call.1} parent=1 // pred_check
      _
    $region15: #{tpu_custom_call.1} parent=1 // pred_check_branch
      %37 = sbr.rel (0) target = $region17
    $region16: #{tpu_custom_call.1} parent=1 // pred_region
      %39 = dma.done [#allocation6], 32
    $region17: #{tpu_custom_call.1} parent=1 // pred_fallthru
      _
    %v40 = vld [vmem:[#allocation2] sm:$0xff]
    %v41 = vunpack.c.l.bf16 %v40
    %v42 = vunpack.c.h.bf16 %v40
    %v43 = vmul.f32 %v41, %v41
    %v44 = vmul.f32 %v42, %v42
    %v45 = vadd.f32 %v43, %v44
    %46 = vadd.xlane.f32.xlu0 %v45
    %v47 = vpop.xlane.xlu0 %46
    %v48 = vrcp.pop 256.0
    %v49 = vmul.f32 256.0, %v48
    %v50 = vsub.f32 1.0, %v49
    %v51 = vmul.f32 %v48, %v50
    %v52 = vadd.f32 %v48, %v51
    %vm53 = vweird.f32 %v48
    %v54 = vsel %vm53, %v48, %v52
    %v55 = vmul.f32 %v47, %v54
    %v56 = vld [vmem:[#allocation5] sm:$0x3]
    %v57 = vadd.f32 %v55, 1e-06
    %v58 = vrsqrt.pop %v57
    %v59 = vmul.f32 %v58, %v57
    %v60 = vmul.f32 %v59, %v58
    %v61 = vmul.f32 0.5, %v60
    %v62 = vsub.f32 1.5, %v61
    %v63 = vmul.f32 %v58, %v62
    %vm64 = vweird.f32 %v57
    %vm65 = vweird.f32 %v58
    %vm66 = vmor %vm64, %vm65
    %v67 = vsel %vm66, %v58, %v63
    %v68 = vmul.f32 %v41, %v67
    %v69 = vmul.f32 %v42, %v67
    %v71 = vperm.slane %v56, 0
    %v72 = vperm.slane %v56, 1
    %v75 = vmul.f32 %v71, %v68
    %v76 = vmul.f32 %v72, %v69
    %v77 = vpack.c.bf16 %v76, %v75
    %78 = vst [vmem:[#allocation7] sm:$0xff] %v77
    // Predicated region
    $region18: #{tpu_custom_call.1} parent=1 // pred_check
      _
    $region19: #{tpu_custom_call.1} parent=1 // pred_check_branch
      %80 = sbr.rel (0) target = $region21
    $region20: #{tpu_custom_call.1} parent=1 // pred_region
      %82 = vsyncadd [#allocation4], 0
      %s84 = sshll.u32 [#allocation7], 4
      %s85 = int_to_ptr.vmem [resolvable:$true] %s84
      %s86 = sshll.u32 %s2, 4
      %s87 = int_to_ptr.hbm [resolvable:$true] %s86
      %89 = dma.vmem_to_hbm [thread:$0]  %s85, 128, %s87, [#allocation4]
    $region21: #{tpu_custom_call.1} parent=1 // pred_fallthru
      _
    // Predicated region
    $region22: #{tpu_custom_call.1} parent=1 // pred_check
      _
    $region23: #{tpu_custom_call.1} parent=1 // pred_check_branch
      %91 = sbr.rel (0) target = $region25
    $region24: #{tpu_custom_call.1} parent=1 // pred_region
      %93 = dma.done [#allocation4], 128
    $region25: #{tpu_custom_call.1} parent=1 // pred_fallthru
      _
    %94 = vsyncpa [#allocation3], 1
    %95 = vsyncpa [#allocation6], 1
    %96 = vsyncpa [#allocation4], 1

</llo_original>
